<compile_context>
chip_gen: v5e
topology: v5e:2x2
jax: 0.10.0
libtpu: 0.0.40
codegen_flags: <defaults>
</compile_context>

<pallas_src>
import jax
import jax.numpy as jnp
from jax.experimental import pallas as pl
from jax.experimental.pallas import tpu as pltpu


def _round_up(x, m):
    return ((x + m - 1) // m) * m


def decoder_kernel(z_ref, w1_ref, b1_ref, w2_ref, b2_ref, out_ref):
    # Two MXU matmuls (f32 accumulate) + bias add + ReLU on VMEM-resident tiles.
    z = z_ref[...].astype(w1_ref.dtype)                                  # in-kernel cast (no-op for f32)
    h = jnp.dot(z, w1_ref[...], preferred_element_type=jnp.float32)      # (TB, Hp)
    h = jnp.maximum(h + b1_ref[...], 0.0)                                # bias + ReLU in f32
    o = jnp.dot(h.astype(w2_ref.dtype), w2_ref[...],
                preferred_element_type=jnp.float32)                      # (TB, O)
    out_ref[...] = (o + b2_ref[...]).astype(out_ref.dtype)


def prep_decoder_params(w1, b1, w2, b2, *, compute_dtype=jnp.float32):
    """One-time parameter prep (hoisted out of the forward pass).

    w1: (L, H) = torch fc1.weight.T; b1: (H,) or (1, H)
    w2: (H, O) = torch fc2.weight.T; b2: (O,) or (1, O)

    Hidden dim is zero-padded H -> 128 (lane-dense K for the 2nd matmul; zeros are
    inert through ReLU and the matmul).  The output dim is left unpadded so the
    writeback stream stays narrow.
    """
    L, H = w1.shape
    O = w2.shape[1]
    Hp = _round_up(H, 128)
    cdt = jnp.dtype(compute_dtype)
    w1p = jnp.zeros((L, Hp), cdt).at[:, :H].set(w1.astype(cdt))
    b1p = jnp.zeros((1, Hp), jnp.float32).at[:, :H].set(
        b1.reshape(1, -1).astype(jnp.float32))
    w2p = jnp.zeros((Hp, O), cdt).at[:H, :].set(w2.astype(cdt))
    b2p = b2.reshape(1, -1).astype(jnp.float32)
    return (w1p, b1p, w2p, b2p)


def decoder_forward(z, params, *, block_batch=4096, fallback_batch=0):
    """Pallas forward of Decoder.  z: (B, L); params from prep_decoder_params."""
    w1p, b1p, w2p, b2p = params
    B, L = z.shape
    Hp = w1p.shape[1]
    O = w2p.shape[1]

    # Tiny-batch fallback: one fused XLA dot chain beats the pallas_call fixed cost
    # when there is nothing to pipeline.  Disabled by default (fallback_batch=0).
    if B <= fallback_batch:
        h = jnp.maximum(
            jnp.dot(z.astype(w1p.dtype), w1p, preferred_element_type=jnp.float32) + b1p,
            0.0)
        return jnp.dot(h.astype(w2p.dtype), w2p,
                       preferred_element_type=jnp.float32) + b2p

    # Batch tile: large enough that per-step HBM streaming hides the ~0.35us step
    # overhead.  Single full block when B fits; otherwise a multiple of 8 with a
    # ragged (masked) last block handled by Pallas -- no pad/slice copies needed.
    if B <= block_batch:
        TB = B
    else:
        TB = _round_up(block_batch, 8)
    grid = (pl.cdiv(B, TB),)

    w_itemsize = w1p.dtype.itemsize
    flops = 2 * B * (L * Hp + Hp * O)
    bytes_accessed = (
        B * L * z.dtype.itemsize          # z read
        + L * Hp * w_itemsize             # w1 (resident, read once)
        + Hp * O * w_itemsize             # w2 (resident, read once)
        + (Hp + O) * 4                    # biases
        + B * O * 4                       # output write (unpadded)
    )

    vmem = pltpu.MemorySpace.VMEM
    return pl.pallas_call(
        decoder_kernel,
        out_shape=jax.ShapeDtypeStruct((B, O), jnp.float32),
        grid=grid,
        in_specs=[
            pl.BlockSpec((TB, L), lambda i: (i, 0), memory_space=vmem),   # z tile (pipelined)
            pl.BlockSpec((L, Hp), lambda i: (0, 0), memory_space=vmem),   # w1 (resident)
            pl.BlockSpec((1, Hp), lambda i: (0, 0), memory_space=vmem),   # b1 (resident)
            pl.BlockSpec((Hp, O), lambda i: (0, 0), memory_space=vmem),   # w2 (resident)
            pl.BlockSpec((1, O), lambda i: (0, 0), memory_space=vmem),    # b2 (resident)
        ],
        out_specs=pl.BlockSpec((TB, O), lambda i: (i, 0), memory_space=vmem),
        compiler_params=pltpu.CompilerParams(
            # TODO(synk): on v7x consider pltpu.CORE_PARALLEL / core_map to guarantee
            # the batch axis splits across both TensorCores.
            dimension_semantics=("parallel",),
            vmem_limit_bytes=32 * 1024 * 1024,
        ),
        cost_estimate=pl.CostEstimate(
            flops=flops, transcendentals=0, bytes_accessed=bytes_accessed),
    )(z, w1p, b1p, w2p, b2p)


def init_decoder_params(key, latent_dim, output_dim, hidden=50):
    # Deterministic init mirroring nn.Linear's uniform(-1/sqrt(fan_in), 1/sqrt(fan_in)).
    k1, k2, k3, k4 = jax.random.split(key, 4)
    bound1 = 1.0 / jnp.sqrt(latent_dim)
    bound2 = 1.0 / jnp.sqrt(hidden)
    w1 = jax.random.uniform(k1, (latent_dim, hidden), jnp.float32, -bound1, bound1)
    b1 = jax.random.uniform(k2, (1, hidden), jnp.float32, -bound1, bound1)
    w2 = jax.random.uniform(k3, (hidden, output_dim), jnp.float32, -bound2, bound2)
    b2 = jax.random.uniform(k4, (1, output_dim), jnp.float32, -bound2, bound2)
    return w1, b1, w2, b2


if __name__ == "__main__":
    latent_dim = 16
    output_dim = 32
    batch = 8

    key = jax.random.PRNGKey(0)
    kz, kp = jax.random.split(key)
    z = jax.random.normal(kz, (batch, latent_dim), jnp.float32)
    w1, b1, w2, b2 = init_decoder_params(kp, latent_dim, output_dim)
    params = prep_decoder_params(w1, b1, w2, b2)      # one-time weight prep

    # Reference (pure JAX).
    def ref_fn(x):
        return jnp.maximum(x @ w1 + b1, 0.0) @ w2 + b2

    # 1) Small batch, single full (unpadded) block through the Pallas kernel.
    out = jax.block_until_ready(decoder_forward(z, params))
    assert out.shape == (batch, output_dim)
    assert jnp.allclose(out, ref_fn(z), atol=1e-5, rtol=1e-5)

    # 2) Ragged batch exercising the multi-step grid with a masked last block.
    z2 = jax.random.normal(jax.random.PRNGKey(1), (20, latent_dim), jnp.float32)
    out2 = jax.block_until_ready(decoder_forward(z2, params, block_batch=8))
    assert out2.shape == (20, output_dim)
    assert jnp.allclose(out2, ref_fn(z2), atol=1e-5, rtol=1e-5)

    # 3) Tiny-batch fallback path (plain fused jnp).
    out3 = jax.block_until_ready(decoder_forward(z, params, fallback_batch=1024))
    assert jnp.allclose(out3, ref_fn(z), atol=1e-5, rtol=1e-5)

    print("KERNEL_OK")
</pallas_src>

<mosaic_0001>
module attributes {stable_mosaic.version = 11 : i64} {
  func.func @decoder_kernel(%arg0: i32, %arg1: memref<8x16xf32, #tpu.memory_space<vmem>>, %arg2: memref<16x128xf32, #tpu.memory_space<vmem>>, %arg3: memref<1x128xf32, #tpu.memory_space<vmem>>, %arg4: memref<128x32xf32, #tpu.memory_space<vmem>>, %arg5: memref<1x32xf32, #tpu.memory_space<vmem>>, %arg6: memref<8x32xf32, #tpu.memory_space<vmem>>) attributes {dimension_semantics = [#tpu.dimension_semantics<parallel>], iteration_bounds = array<i64: 1>, scalar_prefetch = 0 : i64, scratch_operands = 0 : i64, tpu.core_type = #tpu.core_type<tc>, window_params = [{transform_indices = @transform_0, window_bounds = array<i64: 8, 16>}, {pipeline_mode = #tpu.pipeline_mode<synchronous>, transform_indices = @transform_1, window_bounds = array<i64: 16, 128>}, {pipeline_mode = #tpu.pipeline_mode<synchronous>, transform_indices = @transform_2, window_bounds = array<i64: 1, 128>}, {pipeline_mode = #tpu.pipeline_mode<synchronous>, transform_indices = @transform_3, window_bounds = array<i64: 128, 32>}, {pipeline_mode = #tpu.pipeline_mode<synchronous>, transform_indices = @transform_4, window_bounds = array<i64: 1, 32>}, {transform_indices = @transform_5, window_bounds = array<i64: 8, 32>}]} {
    %c0 = arith.constant 0 : index
    %c0_0 = arith.constant 0 : index
    %0 = vector.load %arg1[%c0, %c0_0] : memref<8x16xf32, #tpu.memory_space<vmem>>, vector<8x16xf32>
    %c0_1 = arith.constant 0 : index
    %c0_2 = arith.constant 0 : index
    %1 = vector.load %arg2[%c0_1, %c0_2] : memref<16x128xf32, #tpu.memory_space<vmem>>, vector<16x128xf32>
    %cst = arith.constant dense<0.000000e+00> : vector<8x128xf32>
    %2 = tpu.matmul %0, %1, %cst {dimension_numbers = #tpu.dot_dimension_numbers<[1], [0], [0], [1], [0, 0, 1, 1], [], []>} : vector<8x16xf32>, vector<16x128xf32>, vector<8x128xf32> -> vector<8x128xf32>
    %c0_3 = arith.constant 0 : index
    %c0_4 = arith.constant 0 : index
    %3 = vector.load %arg3[%c0_3, %c0_4] : memref<1x128xf32, #tpu.memory_space<vmem>>, vector<1x128xf32>
    %4 = vector.broadcast %3 : vector<1x128xf32> to vector<8x128xf32>
    %5 = arith.addf %2, %4 : vector<8x128xf32>
    %cst_5 = arith.constant 0.000000e+00 : f32
    %6 = vector.broadcast %cst_5 : f32 to vector<8x128xf32>
    %7 = arith.maximumf %5, %6 : vector<8x128xf32>
    %c0_6 = arith.constant 0 : index
    %c0_7 = arith.constant 0 : index
    %8 = vector.load %arg4[%c0_6, %c0_7] : memref<128x32xf32, #tpu.memory_space<vmem>>, vector<128x32xf32>
    %cst_8 = arith.constant dense<0.000000e+00> : vector<8x32xf32>
    %9 = tpu.matmul %7, %8, %cst_8 {dimension_numbers = #tpu.dot_dimension_numbers<[1], [0], [0], [1], [0, 0, 1, 1], [], []>} : vector<8x128xf32>, vector<128x32xf32>, vector<8x32xf32> -> vector<8x32xf32>
    %c0_9 = arith.constant 0 : index
    %c0_10 = arith.constant 0 : index
    %10 = vector.load %arg5[%c0_9, %c0_10] : memref<1x32xf32, #tpu.memory_space<vmem>>, vector<1x32xf32>
    %11 = vector.broadcast %10 : vector<1x32xf32> to vector<8x32xf32>
    %12 = arith.addf %9, %11 : vector<8x32xf32>
    %c0_11 = arith.constant 0 : index
    %c0_12 = arith.constant 0 : index
    %13 = vector.load %arg6[%c0_11, %c0_12] : memref<8x32xf32, #tpu.memory_space<vmem>>, vector<8x32xf32>
    tpu.vector_store %arg6[%c0_11, %c0_12], %12 {strides = array<i32>} : memref<8x32xf32, #tpu.memory_space<vmem>>, vector<8x32xf32>,
    return
  }
  func.func @transform_0(%arg0: i32) -> (i32, i32) {
    %c0_i32 = arith.constant 0 : i32
    %c0_i32_0 = arith.constant 0 : i32
    return %arg0, %c0_i32 : i32, i32
  }
  func.func @transform_1(%arg0: i32) -> (i32, i32) {
    %c0_i32 = arith.constant 0 : i32
    %c0_i32_0 = arith.constant 0 : i32
    %c0_i32_1 = arith.constant 0 : i32
    return %c0_i32, %c0_i32_0 : i32, i32
  }
  func.func @transform_2(%arg0: i32) -> (i32, i32) {
    %c0_i32 = arith.constant 0 : i32
    %c0_i32_0 = arith.constant 0 : i32
    %c0_i32_1 = arith.constant 0 : i32
    return %c0_i32, %c0_i32_0 : i32, i32
  }
  func.func @transform_3(%arg0: i32) -> (i32, i32) {
    %c0_i32 = arith.constant 0 : i32
    %c0_i32_0 = arith.constant 0 : i32
    %c0_i32_1 = arith.constant 0 : i32
    return %c0_i32, %c0_i32_0 : i32, i32
  }
  func.func @transform_4(%arg0: i32) -> (i32, i32) {
    %c0_i32 = arith.constant 0 : i32
    %c0_i32_0 = arith.constant 0 : i32
    %c0_i32_1 = arith.constant 0 : i32
    return %c0_i32, %c0_i32_0 : i32, i32
  }
  func.func @transform_5(%arg0: i32) -> (i32, i32) {
    %c0_i32 = arith.constant 0 : i32
    %c0_i32_0 = arith.constant 0 : i32
    return %arg0, %c0_i32 : i32, i32
  }
}

</mosaic_0001>

<llo_original>
// kernel: tpu_custom_call.1
$region0: #{tpu_custom_call.1}
  #allocation0 [shape = 'u32[]', space=smem, size = 0x4, offset = 0x4, fixed_abs, tag = 'smem constant byte address 0x4 - core index']
  #allocation1 [shape = 'u32[72,128]{1,0:T(1,128)}', space=vmem, size = 0x9000, scoped, tag = 'internal scratch']
  %s0 = inlined_call_operand.vmem [shape: f32[8,16], index: 0, kind: input, shape index: {}]
  %s1 = inlined_call_operand.vmem [shape: f32[16,128], index: 1, kind: input, shape index: {}]
  %s2 = inlined_call_operand.vmem [shape: f32[1,128], index: 2, kind: input, shape index: {}]
  %s3 = inlined_call_operand.vmem [shape: f32[128,32], index: 3, kind: input, shape index: {}]
  %s4 = inlined_call_operand.vmem [shape: f32[1,32], index: 4, kind: input, shape index: {}]
  %s5 = inlined_call_operand.hbm [shape: f32[8,32], index: 5, kind: output, shape index: {}]
  %s6 = sld [smem:[#allocation0]]
  $region30: #{tpu_custom_call.1} parent=0
    _
  %s8 = ssub.s32 1, %s6
  %s9 = scalar_select 0, %s8, %s6
  $region1: #{tpu_custom_call.1} parent=0
    #allocation2 [shape = 'u8[4096]{0}', space=vmem, size = 0x1000, scoped, tag = 'output window, operand 0, single buffered']
    #allocation3 [shape = 's32[1]{0}', space=sflag, size = 0x4, scoped, tag = 'scoped memory for tpu_custom_call.1']
    %10 = vsyncpa [#allocation3], 0
    // Predicated region
    $region2: #{tpu_custom_call.1} parent=1 // pred_check
      _
    $region3: #{tpu_custom_call.1} parent=1 // pred_check_branch
      %12 = sbr.rel (0) target = $region5
    $region4: #{tpu_custom_call.1} parent=1 // pred_region
      _
    $region5: #{tpu_custom_call.1} parent=1 // pred_fallthru
      _
    // Predicated region
    $region6: #{tpu_custom_call.1} parent=1 // pred_check
      _
    $region7: #{tpu_custom_call.1} parent=1 // pred_check_branch
      %14 = sbr.rel (0) target = $region9
    $region8: #{tpu_custom_call.1} parent=1 // pred_region
      _
    $region9: #{tpu_custom_call.1} parent=1 // pred_fallthru
      _
    // Predicated region
    $region10: #{tpu_custom_call.1} parent=1 // pred_check
      _
    $region11: #{tpu_custom_call.1} parent=1 // pred_check_branch
      %16 = sbr.rel (0) target = $region13
    $region12: #{tpu_custom_call.1} parent=1 // pred_region
      _
    $region13: #{tpu_custom_call.1} parent=1 // pred_fallthru
      _
    // Predicated region
    $region14: #{tpu_custom_call.1} parent=1 // pred_check
      _
    $region15: #{tpu_custom_call.1} parent=1 // pred_check_branch
      %18 = sbr.rel (0) target = $region17
    $region16: #{tpu_custom_call.1} parent=1 // pred_region
      _
    $region17: #{tpu_custom_call.1} parent=1 // pred_fallthru
      _
    // Predicated region
    $region18: #{tpu_custom_call.1} parent=1 // pred_check
      _
    $region19: #{tpu_custom_call.1} parent=1 // pred_check_branch
      %20 = sbr.rel (0) target = $region21
    $region20: #{tpu_custom_call.1} parent=1 // pred_region
      _
    $region21: #{tpu_custom_call.1} parent=1 // pred_fallthru
      _
    %v21 = vld [vmem:[%s0] sm:$0xff]
    %v22 = vld [vmem:[%s1] sm:$0xff]
    %v23 = vld [vmem:[%s1 + $0x8] sm:$0xff]
    %v24 = vld [vmem:[%s2] sm:$0x1]
    %v26 = vperm.slane %v24, 0
    %vm28 = vcmask 130048
    %v30 = vsel %vm28, %v21, 0
    %32 = vmatpush.msra.mxu0 0.0
    %33 = vmatpush.msra.mxu0 0.0
    %34 = vmatpush.msra.mxu0 0.0
    %35 = vmatpush.msra.mxu0 0.0
    %36 = vmatpush.msra.mxu0 0.0
    %37 = vmatpush.msra.mxu0 0.0
    %38 = vmatpush.msra.mxu0 0.0
    %39 = vmatpush.msra.mxu0 0.0
    %40 = vmatpush.msra.mxu0 0.0
    %41 = vmatpush.msra.mxu0 0.0
    %42 = vmatpush.msra.mxu0 0.0
    %43 = vmatpush.msra.mxu0 0.0
    %44 = vmatpush.msra.mxu0 0.0
    %45 = vmatpush.msra.mxu0 0.0
    %46 = vmatpush.msra.mxu0 %v23
    %47 = vmatpush.msra.mxu0 %v22
    %48 = vmatmul.f32.gmra.mxu0 %v30
    %v49 = vpop.f32.mrf.mxu0
    %v50 = vadd.f32 %v26, %v49
    %51 = vdwg.mxu0
    %v52 = vmax.f32 %v50, 0.0
    %v53 = vld [vmem:[%s3] sm:$0xff]
    %v54 = vld [vmem:[%s3 + $0x8] sm:$0xff]
    %v55 = vld [vmem:[%s3 + $0x10] sm:$0xff]
    %v56 = vld [vmem:[%s3 + $0x18] sm:$0xff]
    %v57 = vld [vmem:[%s3 + $0x20] sm:$0xff]
    %v58 = vld [vmem:[%s3 + $0x28] sm:$0xff]
    %v59 = vld [vmem:[%s3 + $0x30] sm:$0xff]
    %v60 = vld [vmem:[%s3 + $0x38] sm:$0xff]
    %v61 = vld [vmem:[%s3 + $0x40] sm:$0xff]
    %v62 = vld [vmem:[%s3 + $0x48] sm:$0xff]
    %v63 = vld [vmem:[%s3 + $0x50] sm:$0xff]
    %v64 = vld [vmem:[%s3 + $0x58] sm:$0xff]
    %v65 = vld [vmem:[%s3 + $0x60] sm:$0xff]
    %v66 = vld [vmem:[%s3 + $0x68] sm:$0xff]
    %v67 = vld [vmem:[%s3 + $0x70] sm:$0xff]
    %v68 = vld [vmem:[%s3 + $0x78] sm:$0xff]
    %v69 = vld [vmem:[%s4] sm:$0x1]
    %v71 = vperm.slane %v69, 0
    %73 = vmatpush.msra.mxu0 %v68
    %74 = vmatpush.msra.mxu0 %v67
    %75 = vmatpush.msra.mxu0 %v66
    %76 = vmatpush.msra.mxu0 %v65
    %77 = vmatpush.msra.mxu0 %v64
    %78 = vmatpush.msra.mxu0 %v63
    %79 = vmatpush.msra.mxu0 %v62
    %80 = vmatpush.msra.mxu0 %v61
    %81 = vmatpush.msra.mxu0 %v60
    %82 = vmatpush.msra.mxu0 %v59
    %83 = vmatpush.msra.mxu0 %v58
    %84 = vmatpush.msra.mxu0 %v57
    %85 = vmatpush.msra.mxu0 %v56
    %86 = vmatpush.msra.mxu0 %v55
    %87 = vmatpush.msra.mxu0 %v54
    %88 = vmatpush.msra.mxu0 %v53
    %89 = vmatmul.f32.gmra.mxu0 %v52
    %v90 = vpop.f32.mrf.mxu0
    %v91 = vadd.f32 %v71, %v90
    %92 = vdwg.mxu0
    %vm93 = vcmask 261120
    %94 = vst.msk [vmem:[#allocation2] sm:$0xff] %vm93, %v91
    // Predicated region
    $region22: #{tpu_custom_call.1} parent=1 // pred_check
      _
    $region23: #{tpu_custom_call.1} parent=1 // pred_check_branch
      %96 = sbr.rel (0) target = $region25
    $region24: #{tpu_custom_call.1} parent=1 // pred_region
      %98 = vsyncadd [#allocation3], 0
      %s100 = sshll.u32 [#allocation2], 4
      %s101 = int_to_ptr.vmem [resolvable:$true] %s100
      %s102 = sshll.u32 %s5, 4
      %s103 = int_to_ptr.hbm [resolvable:$true] %s102
      %105 = dma.vmem_to_hbm [thread:$0]  %s101, 128, %s103, [#allocation3]
    $region25: #{tpu_custom_call.1} parent=1 // pred_fallthru
      _
    // Predicated region
    $region26: #{tpu_custom_call.1} parent=1 // pred_check
      _
    $region27: #{tpu_custom_call.1} parent=1 // pred_check_branch
      %107 = sbr.rel (0) target = $region29
    $region28: #{tpu_custom_call.1} parent=1 // pred_region
      %109 = dma.done [#allocation3], 128
    $region29: #{tpu_custom_call.1} parent=1 // pred_fallthru
      _
    %110 = vsyncpa [#allocation3], 1

</llo_original>
